<compile_context>
chip_gen: v7x
topology: tpu7x:2x2x1
jax: 0.10.0
libtpu: 0.0.40
codegen_flags: <defaults>
</compile_context>

<pallas_src>
import numpy as np
import jax
import jax.numpy as jnp
from jax.experimental import pallas as pl
from jax.experimental.pallas import tpu as pltpu  # noqa: F401  (TPU backend assumed)


def _bilinear_matrix(out_size: int, in_size: int) -> np.ndarray:
    """F.interpolate(mode='bilinear', align_corners=False) along one axis, as a matrix."""
    m = np.zeros((out_size, in_size), dtype=np.float32)
    scale = in_size / out_size
    for i in range(out_size):
        src = max((i + 0.5) * scale - 0.5, 0.0)
        i0 = min(int(np.floor(src)), in_size - 1)
        i1 = min(i0 + 1, in_size - 1)
        l1 = src - i0
        m[i, i0] += 1.0 - l1
        m[i, i1] += l1
    return m


def _classifier_kernel(low_ref, feat_ref, rT_ref, w1aT_ref, w1bT_ref,
                       shift_ref, w2T_ref, b2_ref, o_ref):
    B = low_ref.shape[0]
    bf16 = rT_ref.dtype
    # B is static and small: fully unrolled, no grid-step overhead.
    for b in range(B):
        # 128 -> 64 channel projection BEFORE upsampling (reassociation; BN scale folded in).
        gp = jnp.dot(w1bT_ref[...], feat_ref[b].astype(bf16),
                     preferred_element_type=jnp.float32)                     # (64, h*w)
        # Bilinear upsample (align_corners=False) == right-matmul with R^T = kron(Ry,Rx)^T.
        up = jnp.dot(gp.astype(bf16), rT_ref[...],
                     preferred_element_type=jnp.float32)                     # (64, H*W)
        # Low-level half of the split 1x1 conv, accumulated into the same f32 tile.
        y1 = up + jnp.dot(w1aT_ref[...], low_ref[b].astype(bf16),
                          preferred_element_type=jnp.float32)                # (64, H*W)
        # BatchNorm shift + ReLU (scale already folded into the weights), f32 elementwise.
        z = jnp.maximum(y1 + shift_ref[...], 0.0)
        # Conv2d(64, num_classes, 1) + bias; head zero-padded to 8 sublane rows.
        out = jnp.dot(w2T_ref[...], z.astype(bf16),
                      preferred_element_type=jnp.float32) + b2_ref[...]      # (nc_pad, H*W)
        o_ref[b] = out.astype(o_ref.dtype)


def simple_classifier_eval(f0, f1, params):
    """f0: (B, 64, H, W) NCHW, f1: (B, 128, h, w) NCHW -> (B, num_classes, H+2, W+2) NCHW."""
    B, c_low, H, W = f0.shape
    _, c_hi, h, w = f1.shape
    assert c_low == 64 and c_hi == 128
    nc = params["w2"].shape[1]
    HW, hw = H * W, h * w
    nc_pad = ((nc + 7) // 8) * 8

    # Channel-major views straight from NCHW (pure reshapes, no transposes, no casts:
    # the bf16 cast happens inside the kernel, right before the MXU dots).
    low = f0.reshape(B, c_low, HW)
    feat = f1.reshape(B, c_hi, hw)

    # R^T = kron(Ry, Rx)^T : (h*w, H*W). For the 2x scale the bilinear weights are
    # dyadic (0.25/0.75), so bf16 is exact.
    RT = jnp.asarray(np.kron(_bilinear_matrix(H, h), _bilinear_matrix(W, w)).T,
                     dtype=jnp.bfloat16)

    # Folded eval-mode BN.
    eps = 1e-5
    scale1 = params["bn_gamma"] * jax.lax.rsqrt(params["bn_var"] + eps)   # (64,)
    shift1 = params["bn_beta"] - params["bn_mean"] * scale1               # (64,)

    # 1x1 conv weights in (C_out, C_in) orientation with the BN scale folded into the
    # output-channel rows (the @R^T upsample path inherits the row scaling), bf16 for MXU.
    w1aT = (jnp.asarray(params["w1a"]).T * scale1[:, None]).astype(jnp.bfloat16)   # (64, 64)
    w1bT = (jnp.asarray(params["w1b"]).T * scale1[:, None]).astype(jnp.bfloat16)   # (64, 128)
    shift = shift1.reshape(c_low, 1).astype(jnp.float32)

    # Classifier head zero-padded to a full 8-row sublane tile -> unmasked stores.
    w2T = (jnp.zeros((nc_pad, c_low), jnp.float32)
           .at[:nc].set(jnp.asarray(params["w2"]).T)
           .astype(jnp.bfloat16))                                                  # (nc_pad, 64)
    b2 = jnp.zeros((nc_pad, 1), jnp.float32).at[:nc, 0].set(jnp.asarray(params["b2"]))

    # No grid: everything (a few hundred KiB) lives in VMEM for a single kernel step.
    interior = pl.pallas_call(
        _classifier_kernel,
        out_shape=jax.ShapeDtypeStruct((B, nc_pad, HW), jnp.float32),
    )(low, feat, RT, w1aT, w1bT, shift, w2T, b2)

    # Zero-padding border from padding=1 on the (bias-free) first 1x1 conv, propagated
    # through eval-mode BN -> ReLU -> second conv: batch independent, computed once.
    zb = jnp.maximum(shift1, 0.0)                                        # (64,)
    border = zb @ jnp.asarray(params["w2"]) + jnp.asarray(params["b2"])  # (nc,)

    interior = interior[:, :nc].reshape(B, nc, H, W)
    out = jnp.broadcast_to(border[None, :, None, None], (B, nc, H + 2, W + 2))
    out = out.at[:, :, 1:-1, 1:-1].set(interior)                         # already NCHW
    return out


def _reference(f0, f1, params):
    """Plain-JAX f32 reference of the same eval forward (sanity check)."""
    B, _, H, W = f0.shape
    _, _, h, w = f1.shape
    Ry = jnp.asarray(_bilinear_matrix(H, h))
    Rx = jnp.asarray(_bilinear_matrix(W, w))
    up = jnp.einsum('Hh,bchw->bcHw', Ry, f1)
    up = jnp.einsum('Ww,bcHw->bcHW', Rx, up)
    x = jnp.concatenate([f0, up], axis=1)                         # (B, 192, H, W)
    xp = jnp.pad(x, ((0, 0), (0, 0), (1, 1), (1, 1)))             # padding=1
    w1 = jnp.concatenate([params["w1a"], params["w1b"]], axis=0)  # (192, 64)
    y1 = jnp.einsum('bchw,cd->bdhw', xp, w1)
    eps = 1e-5
    scale = params["bn_gamma"] * jax.lax.rsqrt(params["bn_var"] + eps)
    shift = params["bn_beta"] - params["bn_mean"] * scale
    z = jnp.maximum(y1 * scale[None, :, None, None] + shift[None, :, None, None], 0.0)
    y2 = jnp.einsum('bdhw,dk->bkhw', z, params["w2"]) + params["b2"][None, :, None, None]
    return y2


if __name__ == "__main__":
    B, H, W = 2, 16, 16          # low-level feature spatial size
    h, w = 8, 8                  # coarse feature spatial size
    num_classes = 4

    key = jax.random.PRNGKey(0)
    keys = jax.random.split(key, 10)
    f0 = jax.random.normal(keys[0], (B, 64, H, W), jnp.float32)    # feature[0]
    f1 = jax.random.normal(keys[1], (B, 128, h, w), jnp.float32)   # feature[1]

    params = {
        # Conv2d(192, 64, 1, bias=False), stored as (C_in, C_out), split low/up channels
        "w1a": 0.05 * jax.random.normal(keys[2], (64, 64), jnp.float32),
        "w1b": 0.05 * jax.random.normal(keys[3], (128, 64), jnp.float32),
        # BatchNorm2d(64) running stats / affine (eval mode)
        "bn_gamma": 1.0 + 0.1 * jax.random.normal(keys[4], (64,), jnp.float32),
        "bn_beta": 0.1 * jax.random.normal(keys[5], (64,), jnp.float32),
        "bn_mean": 0.1 * jax.random.normal(keys[6], (64,), jnp.float32),
        "bn_var": jax.random.uniform(keys[7], (64,), jnp.float32, 0.5, 1.5),
        # Conv2d(64, num_classes, 1) with bias, stored as (C_in, C_out)
        "w2": 0.05 * jax.random.normal(keys[8], (64, num_classes), jnp.float32),
        "b2": 0.1 * jax.random.normal(keys[9], (num_classes,), jnp.float32),
    }

    out = simple_classifier_eval(f0, f1, params)
    out = jax.block_until_ready(out)
    assert out.shape == (B, num_classes, H + 2, W + 2), out.shape

    ref = jax.block_until_ready(_reference(f0, f1, params))
    # bf16 MXU operands with f32 accumulation -> ~0.3% relative error vs f32 reference.
    assert np.allclose(np.asarray(out), np.asarray(ref), rtol=1e-2, atol=1e-2), \
        "Pallas kernel mismatch vs JAX reference"

    print("KERNEL_OK")
</pallas_src>

<mosaic_0001>
module attributes {stable_mosaic.version = 11 : i64} {
  func.func @_classifier_kernel(%arg0: memref<2x64x256xf32, #tpu.memory_space<vmem>>, %arg1: memref<2x128x64xf32, #tpu.memory_space<vmem>>, %arg2: memref<64x256xbf16, #tpu.memory_space<vmem>>, %arg3: memref<64x64xbf16, #tpu.memory_space<vmem>>, %arg4: memref<64x128xbf16, #tpu.memory_space<vmem>>, %arg5: memref<64x1xf32, #tpu.memory_space<vmem>>, %arg6: memref<8x64xbf16, #tpu.memory_space<vmem>>, %arg7: memref<8x1xf32, #tpu.memory_space<vmem>>, %arg8: memref<2x8x256xf32, #tpu.memory_space<vmem>>) attributes {dimension_semantics = [], scalar_prefetch = 0 : i64, scratch_operands = 0 : i64, tpu.core_type = #tpu.core_type<tc>} {
    %c0 = arith.constant 0 : index
    %c0_0 = arith.constant 0 : index
    %0 = vector.load %arg4[%c0, %c0_0] : memref<64x128xbf16, #tpu.memory_space<vmem>>, vector<64x128xbf16>
    %c0_1 = arith.constant 0 : index
    %c0_2 = arith.constant 0 : index
    %c0_3 = arith.constant 0 : index
    %1 = vector.load %arg1[%c0_1, %c0_2, %c0_3] : memref<2x128x64xf32, #tpu.memory_space<vmem>>, vector<1x128x64xf32>
    %2 = vector.shape_cast %1 : vector<1x128x64xf32> to vector<128x64xf32>
    %3 = arith.truncf %2 : vector<128x64xf32> to vector<128x64xbf16>
    %cst = arith.constant dense<0.000000e+00> : vector<64x64xf32>
    %4 = tpu.matmul %0, %3, %cst {dimension_numbers = #tpu.dot_dimension_numbers<[1], [0], [0], [1], [0, 0, 1, 1], [], []>} : vector<64x128xbf16>, vector<128x64xbf16>, vector<64x64xf32> -> vector<64x64xf32>
    %5 = arith.truncf %4 : vector<64x64xf32> to vector<64x64xbf16>
    %c0_4 = arith.constant 0 : index
    %c0_5 = arith.constant 0 : index
    %6 = vector.load %arg2[%c0_4, %c0_5] : memref<64x256xbf16, #tpu.memory_space<vmem>>, vector<64x256xbf16>
    %cst_6 = arith.constant dense<0.000000e+00> : vector<64x256xf32>
    %7 = tpu.matmul %5, %6, %cst_6 {dimension_numbers = #tpu.dot_dimension_numbers<[1], [0], [0], [1], [0, 0, 1, 1], [], []>} : vector<64x64xbf16>, vector<64x256xbf16>, vector<64x256xf32> -> vector<64x256xf32>
    %c0_7 = arith.constant 0 : index
    %c0_8 = arith.constant 0 : index
    %8 = vector.load %arg3[%c0_7, %c0_8] : memref<64x64xbf16, #tpu.memory_space<vmem>>, vector<64x64xbf16>
    %c0_9 = arith.constant 0 : index
    %c0_10 = arith.constant 0 : index
    %c0_11 = arith.constant 0 : index
    %9 = vector.load %arg0[%c0_9, %c0_10, %c0_11] : memref<2x64x256xf32, #tpu.memory_space<vmem>>, vector<1x64x256xf32>
    %10 = vector.shape_cast %9 : vector<1x64x256xf32> to vector<64x256xf32>
    %11 = arith.truncf %10 : vector<64x256xf32> to vector<64x256xbf16>
    %cst_12 = arith.constant dense<0.000000e+00> : vector<64x256xf32>
    %12 = tpu.matmul %8, %11, %cst_12 {dimension_numbers = #tpu.dot_dimension_numbers<[1], [0], [0], [1], [0, 0, 1, 1], [], []>} : vector<64x64xbf16>, vector<64x256xbf16>, vector<64x256xf32> -> vector<64x256xf32>
    %13 = arith.addf %7, %12 : vector<64x256xf32>
    %c0_13 = arith.constant 0 : index
    %c0_14 = arith.constant 0 : index
    %14 = vector.load %arg5[%c0_13, %c0_14] : memref<64x1xf32, #tpu.memory_space<vmem>>, vector<64x1xf32>
    %15 = vector.broadcast %14 : vector<64x1xf32> to vector<64x256xf32>
    %16 = arith.addf %13, %15 : vector<64x256xf32>
    %cst_15 = arith.constant 0.000000e+00 : f32
    %17 = vector.broadcast %cst_15 : f32 to vector<64x256xf32>
    %18 = arith.maximumf %16, %17 : vector<64x256xf32>
    %c0_16 = arith.constant 0 : index
    %c0_17 = arith.constant 0 : index
    %19 = vector.load %arg6[%c0_16, %c0_17] : memref<8x64xbf16, #tpu.memory_space<vmem>>, vector<8x64xbf16>
    %20 = arith.truncf %18 : vector<64x256xf32> to vector<64x256xbf16>
    %cst_18 = arith.constant dense<0.000000e+00> : vector<8x256xf32>
    %21 = tpu.matmul %19, %20, %cst_18 {dimension_numbers = #tpu.dot_dimension_numbers<[1], [0], [0], [1], [0, 0, 1, 1], [], []>} : vector<8x64xbf16>, vector<64x256xbf16>, vector<8x256xf32> -> vector<8x256xf32>
    %c0_19 = arith.constant 0 : index
    %c0_20 = arith.constant 0 : index
    %22 = vector.load %arg7[%c0_19, %c0_20] : memref<8x1xf32, #tpu.memory_space<vmem>>, vector<8x1xf32>
    %23 = vector.broadcast %22 : vector<8x1xf32> to vector<8x256xf32>
    %24 = arith.addf %21, %23 : vector<8x256xf32>
    %c0_21 = arith.constant 0 : index
    %c0_22 = arith.constant 0 : index
    %c0_23 = arith.constant 0 : index
    %25 = vector.load %arg8[%c0_21, %c0_22, %c0_23] : memref<2x8x256xf32, #tpu.memory_space<vmem>>, vector<1x8x256xf32>
    %26 = vector.shape_cast %25 : vector<1x8x256xf32> to vector<8x256xf32>
    %27 = vector.shape_cast %24 : vector<8x256xf32> to vector<1x8x256xf32>
    tpu.vector_store %arg8[%c0_21, %c0_22, %c0_23], %27 {strides = array<i32>} : memref<2x8x256xf32, #tpu.memory_space<vmem>>, vector<1x8x256xf32>,
    %c0_24 = arith.constant 0 : index
    %c0_25 = arith.constant 0 : index
    %28 = vector.load %arg4[%c0_24, %c0_25] : memref<64x128xbf16, #tpu.memory_space<vmem>>, vector<64x128xbf16>
    %c1 = arith.constant 1 : index
    %c0_26 = arith.constant 0 : index
    %c0_27 = arith.constant 0 : index
    %29 = vector.load %arg1[%c1, %c0_26, %c0_27] : memref<2x128x64xf32, #tpu.memory_space<vmem>>, vector<1x128x64xf32>
    %30 = vector.shape_cast %29 : vector<1x128x64xf32> to vector<128x64xf32>
    %31 = arith.truncf %30 : vector<128x64xf32> to vector<128x64xbf16>
    %cst_28 = arith.constant dense<0.000000e+00> : vector<64x64xf32>
    %32 = tpu.matmul %28, %31, %cst_28 {dimension_numbers = #tpu.dot_dimension_numbers<[1], [0], [0], [1], [0, 0, 1, 1], [], []>} : vector<64x128xbf16>, vector<128x64xbf16>, vector<64x64xf32> -> vector<64x64xf32>
    %33 = arith.truncf %32 : vector<64x64xf32> to vector<64x64xbf16>
    %c0_29 = arith.constant 0 : index
    %c0_30 = arith.constant 0 : index
    %34 = vector.load %arg2[%c0_29, %c0_30] : memref<64x256xbf16, #tpu.memory_space<vmem>>, vector<64x256xbf16>
    %cst_31 = arith.constant dense<0.000000e+00> : vector<64x256xf32>
    %35 = tpu.matmul %33, %34, %cst_31 {dimension_numbers = #tpu.dot_dimension_numbers<[1], [0], [0], [1], [0, 0, 1, 1], [], []>} : vector<64x64xbf16>, vector<64x256xbf16>, vector<64x256xf32> -> vector<64x256xf32>
    %c0_32 = arith.constant 0 : index
    %c0_33 = arith.constant 0 : index
    %36 = vector.load %arg3[%c0_32, %c0_33] : memref<64x64xbf16, #tpu.memory_space<vmem>>, vector<64x64xbf16>
    %c1_34 = arith.constant 1 : index
    %c0_35 = arith.constant 0 : index
    %c0_36 = arith.constant 0 : index
    %37 = vector.load %arg0[%c1_34, %c0_35, %c0_36] : memref<2x64x256xf32, #tpu.memory_space<vmem>>, vector<1x64x256xf32>
    %38 = vector.shape_cast %37 : vector<1x64x256xf32> to vector<64x256xf32>
    %39 = arith.truncf %38 : vector<64x256xf32> to vector<64x256xbf16>
    %cst_37 = arith.constant dense<0.000000e+00> : vector<64x256xf32>
    %40 = tpu.matmul %36, %39, %cst_37 {dimension_numbers = #tpu.dot_dimension_numbers<[1], [0], [0], [1], [0, 0, 1, 1], [], []>} : vector<64x64xbf16>, vector<64x256xbf16>, vector<64x256xf32> -> vector<64x256xf32>
    %41 = arith.addf %35, %40 : vector<64x256xf32>
    %c0_38 = arith.constant 0 : index
    %c0_39 = arith.constant 0 : index
    %42 = vector.load %arg5[%c0_38, %c0_39] : memref<64x1xf32, #tpu.memory_space<vmem>>, vector<64x1xf32>
    %43 = vector.broadcast %42 : vector<64x1xf32> to vector<64x256xf32>
    %44 = arith.addf %41, %43 : vector<64x256xf32>
    %cst_40 = arith.constant 0.000000e+00 : f32
    %45 = vector.broadcast %cst_40 : f32 to vector<64x256xf32>
    %46 = arith.maximumf %44, %45 : vector<64x256xf32>
    %c0_41 = arith.constant 0 : index
    %c0_42 = arith.constant 0 : index
    %47 = vector.load %arg6[%c0_41, %c0_42] : memref<8x64xbf16, #tpu.memory_space<vmem>>, vector<8x64xbf16>
    %48 = arith.truncf %46 : vector<64x256xf32> to vector<64x256xbf16>
    %cst_43 = arith.constant dense<0.000000e+00> : vector<8x256xf32>
    %49 = tpu.matmul %47, %48, %cst_43 {dimension_numbers = #tpu.dot_dimension_numbers<[1], [0], [0], [1], [0, 0, 1, 1], [], []>} : vector<8x64xbf16>, vector<64x256xbf16>, vector<8x256xf32> -> vector<8x256xf32>
    %c0_44 = arith.constant 0 : index
    %c0_45 = arith.constant 0 : index
    %50 = vector.load %arg7[%c0_44, %c0_45] : memref<8x1xf32, #tpu.memory_space<vmem>>, vector<8x1xf32>
    %51 = vector.broadcast %50 : vector<8x1xf32> to vector<8x256xf32>
    %52 = arith.addf %49, %51 : vector<8x256xf32>
    %c1_46 = arith.constant 1 : index
    %c0_47 = arith.constant 0 : index
    %c0_48 = arith.constant 0 : index
    %53 = vector.load %arg8[%c1_46, %c0_47, %c0_48] : memref<2x8x256xf32, #tpu.memory_space<vmem>>, vector<1x8x256xf32>
    %54 = vector.shape_cast %53 : vector<1x8x256xf32> to vector<8x256xf32>
    %55 = vector.shape_cast %52 : vector<8x256xf32> to vector<1x8x256xf32>
    tpu.vector_store %arg8[%c1_46, %c0_47, %c0_48], %55 {strides = array<i32>} : memref<2x8x256xf32, #tpu.memory_space<vmem>>, vector<1x8x256xf32>,
    return
  }
}

</mosaic_0001>

<llo_original>
// kernel: tpu_custom_call.1
$region0: #{tpu_custom_call.1}
  #allocation0 [shape = 'u32[]', space=smem, size = 0x4, offset = 0x4, fixed_abs, tag = 'smem constant byte address 0x4 - core index']
  #allocation1 [shape = 'u32[144,128]{1,0:T(1,128)}', space=vmem, size = 0x12000, scoped, tag = 'internal scratch']
  %s0 = inlined_call_operand.vmem [shape: f32[2,64,256], index: 0, kind: input, shape index: {}]
  %s1 = inlined_call_operand.vmem [shape: f32[2,128,64], index: 1, kind: input, shape index: {}]
  %s2 = inlined_call_operand.vmem [shape: bf16[64,256], index: 2, kind: input, shape index: {}]
  %s3 = inlined_call_operand.vmem [shape: bf16[64,64], index: 3, kind: input, shape index: {}]
  %s4 = inlined_call_operand.vmem [shape: bf16[64,128], index: 4, kind: input, shape index: {}]
  %s5 = inlined_call_operand.vmem [shape: f32[64,1], index: 5, kind: input, shape index: {}]
  %s6 = inlined_call_operand.vmem [shape: bf16[8,64], index: 6, kind: input, shape index: {}]
  %s7 = inlined_call_operand.vmem [shape: f32[8,1], index: 7, kind: input, shape index: {}]
  %s8 = inlined_call_operand.hbm [shape: f32[2,8,256], index: 8, kind: output, shape index: {}]
  %s9 = sld [smem:[#allocation0]]
  $region42: #{tpu_custom_call.1} parent=0
    _
  %s11 = ssub.s32 1, %s9
  %s12 = scalar_select 0, %s11, %s9
  $region1: #{tpu_custom_call.1} parent=0
    #allocation2 [shape = 'u8[16384]{0}', space=vmem, size = 0x4000, scoped, tag = 'output window, operand 0, single buffered']
    #allocation3 [shape = 's32[1]{0}', space=sflag, size = 0x4, scoped, tag = 'scoped memory for tpu_custom_call.1']
    %13 = vsyncpa [#allocation3], 0
    // Predicated region
    $region2: #{tpu_custom_call.1} parent=1 // pred_check
      _
    $region3: #{tpu_custom_call.1} parent=1 // pred_check_branch
      %15 = sbr.rel (0) target = $region5
    $region4: #{tpu_custom_call.1} parent=1 // pred_region
      _
    $region5: #{tpu_custom_call.1} parent=1 // pred_fallthru
      _
    // Predicated region
    $region6: #{tpu_custom_call.1} parent=1 // pred_check
      _
    $region7: #{tpu_custom_call.1} parent=1 // pred_check_branch
      %17 = sbr.rel (0) target = $region9
    $region8: #{tpu_custom_call.1} parent=1 // pred_region
      _
    $region9: #{tpu_custom_call.1} parent=1 // pred_fallthru
      _
    // Predicated region
    $region10: #{tpu_custom_call.1} parent=1 // pred_check
      _
    $region11: #{tpu_custom_call.1} parent=1 // pred_check_branch
      %19 = sbr.rel (0) target = $region13
    $region12: #{tpu_custom_call.1} parent=1 // pred_region
      _
    $region13: #{tpu_custom_call.1} parent=1 // pred_fallthru
      _
    // Predicated region
    $region14: #{tpu_custom_call.1} parent=1 // pred_check
      _
    $region15: #{tpu_custom_call.1} parent=1 // pred_check_branch
      %21 = sbr.rel (0) target = $region17
    $region16: #{tpu_custom_call.1} parent=1 // pred_region
      _
    $region17: #{tpu_custom_call.1} parent=1 // pred_fallthru
      _
    // Predicated region
    $region18: #{tpu_custom_call.1} parent=1 // pred_check
      _
    $region19: #{tpu_custom_call.1} parent=1 // pred_check_branch
      %23 = sbr.rel (0) target = $region21
    $region20: #{tpu_custom_call.1} parent=1 // pred_region
      _
    $region21: #{tpu_custom_call.1} parent=1 // pred_fallthru
      _
    // Predicated region
    $region22: #{tpu_custom_call.1} parent=1 // pred_check
      _
    $region23: #{tpu_custom_call.1} parent=1 // pred_check_branch
      %25 = sbr.rel (0) target = $region25
    $region24: #{tpu_custom_call.1} parent=1 // pred_region
      _
    $region25: #{tpu_custom_call.1} parent=1 // pred_fallthru
      _
    // Predicated region
    $region26: #{tpu_custom_call.1} parent=1 // pred_check
      _
    $region27: #{tpu_custom_call.1} parent=1 // pred_check_branch
      %27 = sbr.rel (0) target = $region29
    $region28: #{tpu_custom_call.1} parent=1 // pred_region
      _
    $region29: #{tpu_custom_call.1} parent=1 // pred_fallthru
      _
    // Predicated region
    $region30: #{tpu_custom_call.1} parent=1 // pred_check
      _
    $region31: #{tpu_custom_call.1} parent=1 // pred_check_branch
      %29 = sbr.rel (0) target = $region33
    $region32: #{tpu_custom_call.1} parent=1 // pred_region
      _
    $region33: #{tpu_custom_call.1} parent=1 // pred_fallthru
      _
    %v31 = vld [vmem:[%s4] sm:$0xf]
    %v32 = vld [vmem:[%s4 + $0x4] sm:$0xf]
    %v33 = vld [vmem:[%s4 + $0x8] sm:$0xf]
    %v34 = vld [vmem:[%s4 + $0xc] sm:$0xf]
    %v35 = vld [vmem:[%s4 + $0x10] sm:$0xf]
    %v36 = vld [vmem:[%s4 + $0x14] sm:$0xf]
    %v37 = vld [vmem:[%s4 + $0x18] sm:$0xf]
    %v38 = vld [vmem:[%s4 + $0x1c] sm:$0xf]
    %v39 = vld [vmem:[%s1] sm:$0xff]
    %v40 = vld [vmem:[%s1 + $0x8] sm:$0xff]
    %v41 = vld [vmem:[%s1 + $0x10] sm:$0xff]
    %v42 = vld [vmem:[%s1 + $0x18] sm:$0xff]
    %v43 = vld [vmem:[%s1 + $0x20] sm:$0xff]
    %v44 = vld [vmem:[%s1 + $0x28] sm:$0xff]
    %v45 = vld [vmem:[%s1 + $0x30] sm:$0xff]
    %v46 = vld [vmem:[%s1 + $0x38] sm:$0xff]
    %v47 = vld [vmem:[%s1 + $0x40] sm:$0xff]
    %v48 = vld [vmem:[%s1 + $0x48] sm:$0xff]
    %v49 = vld [vmem:[%s1 + $0x50] sm:$0xff]
    %v50 = vld [vmem:[%s1 + $0x58] sm:$0xff]
    %v51 = vld [vmem:[%s1 + $0x60] sm:$0xff]
    %v52 = vld [vmem:[%s1 + $0x68] sm:$0xff]
    %v53 = vld [vmem:[%s1 + $0x70] sm:$0xff]
    %v54 = vld [vmem:[%s1 + $0x78] sm:$0xff]
    %v55 = vpack.c.bf16 %v40, %v39
    %v56 = vpack.c.bf16 %v42, %v41
    %v57 = vpack.c.bf16 %v44, %v43
    %v58 = vpack.c.bf16 %v46, %v45
    %v59 = vpack.c.bf16 %v48, %v47
    %v60 = vpack.c.bf16 %v50, %v49
    %v61 = vpack.c.bf16 %v52, %v51
    %v62 = vpack.c.bf16 %v54, %v53
    %v71 = vunpack.c.l.b16 %v31
    %v72 = vunpack.c.l.b16 %v32
    %v73 = vunpack.c.l.b16 %v33
    %v74 = vunpack.c.l.b16 %v34
    %v75 = vunpack.c.l.b16 %v35
    %v76 = vunpack.c.l.b16 %v36
    %v77 = vunpack.c.l.b16 %v37
    %v78 = vunpack.c.l.b16 %v38
    %v79 = vpack.c.b16 %v72, %v71
    %v80 = vpack.c.b16 %v74, %v73
    %v81 = vpack.c.b16 %v76, %v75
    %v82 = vpack.c.b16 %v78, %v77
    %87 = vmatprep.subr.bf16.mxu0 0
    %88 = vmatpush1.bf16.msra.mxu0 %v55
    %89 = vmatprep.subr.bf16.mxu0 0
    %90 = vmatpush1.bf16.msra.mxu0 %v56
    %91 = vmatprep.subr.bf16.mxu0 0
    %92 = vmatpush1.bf16.msra.mxu0 %v57
    %93 = vmatprep.subr.bf16.mxu0 0
    %94 = vmatpush1.bf16.msra.mxu0 %v58
    %95 = vmatprep.subr.bf16.mxu0 0
    %96 = vmatpush1.bf16.msra.mxu0 %v59
    %97 = vmatprep.subr.bf16.mxu0 0
    %98 = vmatpush1.bf16.msra.mxu0 %v60
    %99 = vmatprep.subr.bf16.mxu0 0
    %100 = vmatpush1.bf16.msra.mxu0 %v61
    %101 = vmatprep.subr.bf16.mxu0 0
    %102 = vmatpush1.bf16.msra.mxu0 %v62
    %103 = vmatprep.subr.bf16.mxu0 0
    %104 = vmatpush1.bf16.msra.mxu0 0
    %105 = vmatprep.subr.bf16.mxu0 0
    %106 = vmatpush1.bf16.msra.mxu0 0
    %107 = vmatprep.subr.bf16.mxu0 0
    %108 = vmatpush1.bf16.msra.mxu0 0
    %109 = vmatprep.subr.bf16.mxu0 0
    %110 = vmatpush1.bf16.msra.mxu0 0
    %111 = vmatprep.subr.bf16.mxu0 0
    %112 = vmatpush1.bf16.msra.mxu0 0
    %113 = vmatprep.subr.bf16.mxu0 0
    %114 = vmatpush1.bf16.msra.mxu0 0
    %115 = vmatprep.subr.bf16.mxu0 0
    %116 = vmatpush1.bf16.msra.mxu0 0
    %117 = vmatprep.subr.bf16.mxu0 0
    %118 = vmatpush1.bf16.msra.mxu0 0
    %119 = vmatprep.mubr.bf16.mxu0 0
    %120 = vmatmul.mubr.bf16.gmra.mrb[0].mxu0 %v79
    %v121 = vpop.f32.mrb[0].mxu0
    %v122 = vadd.f32 0.0, %v121
    %v123 = vpop.f32.mrb[0].mxu0
    %v124 = vpop.f32.mrb[0].mxu0
    %v125 = vadd.f32 0.0, %v124
    %v126 = vpop.f32.mrb[0].mxu0
    %127 = vmatprep.mubr.bf16.mxu0 0
    %128 = vmatmul.mubr.bf16.gmra.mrb[0].mxu0 %v80
    %v129 = vpop.f32.mrb[0].mxu0
    %v130 = vadd.f32 0.0, %v129
    %v131 = vpop.f32.mrb[0].mxu0
    %v132 = vpop.f32.mrb[0].mxu0
    %v133 = vadd.f32 0.0, %v132
    %v134 = vpop.f32.mrb[0].mxu0
    %135 = vmatprep.mubr.bf16.mxu0 0
    %136 = vmatmul.mubr.bf16.gmra.mrb[0].mxu0 %v81
    %v137 = vpop.f32.mrb[0].mxu0
    %v138 = vadd.f32 0.0, %v137
    %v139 = vpop.f32.mrb[0].mxu0
    %v140 = vpop.f32.mrb[0].mxu0
    %v141 = vadd.f32 0.0, %v140
    %v142 = vpop.f32.mrb[0].mxu0
    %143 = vmatprep.mubr.bf16.mxu0 0
    %144 = vmatmul.mubr.bf16.gmra.mrb[0].mxu0 %v82
    %v145 = vpop.f32.mrb[0].mxu0
    %v146 = vadd.f32 0.0, %v145
    %v147 = vpop.f32.mrb[0].mxu0
    %v148 = vpop.f32.mrb[0].mxu0
    %v149 = vadd.f32 0.0, %v148
    %v150 = vpop.f32.mrb[0].mxu0
    %151 = vdwg.mxu0
    %v152 = vpack.c.bf16 %v125, %v122
    %v153 = vpack.c.bf16 %v133, %v130
    %v154 = vpack.c.bf16 %v141, %v138
    %v155 = vpack.c.bf16 %v149, %v146
    %v156 = vld [vmem:[%s2] sm:$0xff]
    %v157 = vld [vmem:[%s2 + $0x8] sm:$0xff]
    %v158 = vld [vmem:[%s2 + $0x10] sm:$0xff]
    %v159 = vld [vmem:[%s2 + $0x18] sm:$0xff]
    %v160 = vld [vmem:[%s2 + $0x20] sm:$0xff]
    %v161 = vld [vmem:[%s2 + $0x28] sm:$0xff]
    %v162 = vld [vmem:[%s2 + $0x30] sm:$0xff]
    %v163 = vld [vmem:[%s2 + $0x38] sm:$0xff]
    %v164 = vld [vmem:[%s3] sm:$0xf]
    %v165 = vld [vmem:[%s3 + $0x4] sm:$0xf]
    %v166 = vld [vmem:[%s3 + $0x8] sm:$0xf]
    %v167 = vld [vmem:[%s3 + $0xc] sm:$0xf]
    %v168 = vld [vmem:[%s3 + $0x10] sm:$0xf]
    %v169 = vld [vmem:[%s3 + $0x14] sm:$0xf]
    %v170 = vld [vmem:[%s3 + $0x18] sm:$0xf]
    %v171 = vld [vmem:[%s3 + $0x1c] sm:$0xf]
    %v172 = vld [vmem:[%s0] sm:$0xff]
    %v173 = vld [vmem:[%s0 + $0x8] sm:$0xff]
    %v174 = vld [vmem:[%s0 + $0x10] sm:$0xff]
    %v175 = vld [vmem:[%s0 + $0x18] sm:$0xff]
    %v176 = vld [vmem:[%s0 + $0x20] sm:$0xff]
    %v177 = vld [vmem:[%s0 + $0x28] sm:$0xff]
    %v178 = vld [vmem:[%s0 + $0x30] sm:$0xff]
    %v179 = vld [vmem:[%s0 + $0x38] sm:$0xff]
    %v180 = vld [vmem:[%s0 + $0x40] sm:$0xff]
    %v181 = vld [vmem:[%s0 + $0x48] sm:$0xff]
    %v182 = vld [vmem:[%s0 + $0x50] sm:$0xff]
    %v183 = vld [vmem:[%s0 + $0x58] sm:$0xff]
    %v184 = vld [vmem:[%s0 + $0x60] sm:$0xff]
    %v185 = vld [vmem:[%s0 + $0x68] sm:$0xff]
    %v186 = vld [vmem:[%s0 + $0x70] sm:$0xff]
    %v187 = vld [vmem:[%s0 + $0x78] sm:$0xff]
    %v188 = vpack.c.bf16 %v174, %v172
    %v189 = vpack.c.bf16 %v175, %v173
    %v190 = vpack.c.bf16 %v178, %v176
    %v191 = vpack.c.bf16 %v179, %v177
    %v192 = vpack.c.bf16 %v182, %v180
    %v193 = vpack.c.bf16 %v183, %v181
    %v194 = vpack.c.bf16 %v186, %v184
    %v195 = vpack.c.bf16 %v187, %v185
    %v204 = vunpack.c.l.b16 %v164
    %v205 = vunpack.c.l.b16 %v165
    %v206 = vunpack.c.l.b16 %v166
    %v207 = vunpack.c.l.b16 %v167
    %v208 = vunpack.c.l.b16 %v168
    %v209 = vunpack.c.l.b16 %v169
    %v210 = vunpack.c.l.b16 %v170
    %v211 = vunpack.c.l.b16 %v171
    %v212 = vpack.c.b16 %v205, %v204
    %v213 = vpack.c.b16 %v207, %v206
    %v214 = vpack.c.b16 %v209, %v208
    %v215 = vpack.c.b16 %v211, %v210
    %vm216 = vcmask 523264
    %v218 = vsel %vm216, %v212, 0
    %v221 = vsel %vm216, %v213, 0
    %v224 = vsel %vm216, %v214, 0
    %v227 = vsel %vm216, %v215, 0
    %229 = vmatprep.subr.bf16.mxu0 %v189
    %230 = vmatpush1.bf16.msra.mxu0 %v188
    %231 = vmatprep.subr.bf16.mxu0 %v191
    %232 = vmatpush1.bf16.msra.mxu0 %v190
    %233 = vmatprep.subr.bf16.mxu0 %v193
    %234 = vmatpush1.bf16.msra.mxu0 %v192
    %235 = vmatprep.subr.bf16.mxu0 %v195
    %236 = vmatpush1.bf16.msra.mxu0 %v194
    %237 = vmatprep.subr.bf16.mxu0 0
    %238 = vmatpush1.bf16.msra.mxu0 0
    %239 = vmatprep.subr.bf16.mxu0 0
    %240 = vmatpush1.bf16.msra.mxu0 0
    %241 = vmatprep.subr.bf16.mxu0 0
    %242 = vmatpush1.bf16.msra.mxu0 0
    %243 = vmatprep.subr.bf16.mxu0 0
    %244 = vmatpush1.bf16.msra.mxu0 0
    %245 = vmatprep.subr.bf16.mxu0 0
    %246 = vmatpush1.bf16.msra.mxu0 0
    %247 = vmatprep.subr.bf16.mxu0 0
    %248 = vmatpush1.bf16.msra.mxu0 0
    %249 = vmatprep.subr.bf16.mxu0 0
    %250 = vmatpush1.bf16.msra.mxu0 0
    %251 = vmatprep.subr.bf16.mxu0 0
    %252 = vmatpush1.bf16.msra.mxu0 0
    %253 = vmatprep.subr.bf16.mxu0 0
    %254 = vmatpush1.bf16.msra.mxu0 0
    %255 = vmatprep.subr.bf16.mxu0 0
    %256 = vmatpush1.bf16.msra.mxu0 0
    %257 = vmatprep.subr.bf16.mxu0 0
    %258 = vmatpush1.bf16.msra.mxu0 0
    %259 = vmatprep.subr.bf16.mxu0 0
    %260 = vmatpush1.bf16.msra.mxu0 0
    %261 = vmatprep.mubr.bf16.mxu0 0
    %262 = vmatmul.mubr.bf16.gmra.mrb[0].mxu0 %v218
    %v263 = vpop.f32.mrb[0].mxu0
    %v264 = vadd.f32 0.0, %v263
    %v265 = vpop.f32.mrb[0].mxu0
    %v266 = vadd.f32 0.0, %v265
    %v267 = vpop.f32.mrb[0].mxu0
    %v268 = vadd.f32 0.0, %v267
    %v269 = vpop.f32.mrb[0].mxu0
    %v270 = vadd.f32 0.0, %v269
    %271 = vmatprep.mubr.bf16.mxu0 0
    %272 = vmatmul.mubr.bf16.gmra.mrb[0].mxu0 %v221
    %v273 = vpop.f32.mrb[0].mxu0
    %v274 = vadd.f32 0.0, %v273
    %v275 = vpop.f32.mrb[0].mxu0
    %v276 = vadd.f32 0.0, %v275
    %v277 = vpop.f32.mrb[0].mxu0
    %v278 = vadd.f32 0.0, %v277
    %v279 = vpop.f32.mrb[0].mxu0
    %v280 = vadd.f32 0.0, %v279
    %281 = vmatprep.mubr.bf16.mxu0 0
    %282 = vmatmul.mubr.bf16.gmra.mrb[0].mxu0 %v224
    %v283 = vpop.f32.mrb[0].mxu0
    %v284 = vadd.f32 0.0, %v283
    %v285 = vpop.f32.mrb[0].mxu0
    %v286 = vadd.f32 0.0, %v285
    %v287 = vpop.f32.mrb[0].mxu0
    %v288 = vadd.f32 0.0, %v287
    %v289 = vpop.f32.mrb[0].mxu0
    %v290 = vadd.f32 0.0, %v289
    %291 = vmatprep.mubr.bf16.mxu0 0
    %292 = vmatmul.mubr.bf16.gmra.mrb[0].mxu0 %v227
    %v293 = vpop.f32.mrb[0].mxu0
    %v294 = vadd.f32 0.0, %v293
    %v295 = vpop.f32.mrb[0].mxu0
    %v296 = vadd.f32 0.0, %v295
    %v297 = vpop.f32.mrb[0].mxu0
    %v298 = vadd.f32 0.0, %v297
    %v299 = vpop.f32.mrb[0].mxu0
    %v300 = vadd.f32 0.0, %v299
    %301 = vdwg.mxu0
    %v310 = vunpack.c.l.b16 %v156
    %v311 = vunpack.c.h.b16 %v156
    %v312 = vunpack.c.l.b16 %v157
    %v313 = vunpack.c.h.b16 %v157
    %v314 = vunpack.c.l.b16 %v158
    %v315 = vunpack.c.h.b16 %v158
    %v316 = vunpack.c.l.b16 %v159
    %v317 = vunpack.c.h.b16 %v159
    %v318 = vunpack.c.l.b16 %v160
    %v319 = vunpack.c.h.b16 %v160
    %v320 = vunpack.c.l.b16 %v161
    %v321 = vunpack.c.h.b16 %v161
    %v322 = vunpack.c.l.b16 %v162
    %v323 = vunpack.c.h.b16 %v162
    %v324 = vunpack.c.l.b16 %v163
    %v325 = vunpack.c.h.b16 %v163
    %v326 = vpack.c.b16 %v312, %v310
    %v327 = vpack.c.b16 %v313, %v311
    %v328 = vpack.c.b16 %v316, %v314
    %v329 = vpack.c.b16 %v317, %v315
    %v330 = vpack.c.b16 %v320, %v318
    %v331 = vpack.c.b16 %v321, %v319
    %v332 = vpack.c.b16 %v324, %v322
    %v333 = vpack.c.b16 %v325, %v323
    %v343 = vsel %vm216, %v152, 0
    %v346 = vsel %vm216, %v153, 0
    %v349 = vsel %vm216, %v154, 0
    %v352 = vsel %vm216, %v155, 0
    %354 = vmatprep.subr.bf16.mxu0 %v327
    %355 = vmatpush1.bf16.msra.mxu0 %v326
    %356 = vmatprep.subr.bf16.mxu0 %v329
    %357 = vmatpush1.bf16.msra.mxu0 %v328
    %358 = vmatprep.subr.bf16.mxu0 %v331
    %359 = vmatpush1.bf16.msra.mxu0 %v330
    %360 = vmatprep.subr.bf16.mxu0 %v333
    %361 = vmatpush1.bf16.msra.mxu0 %v332
    %362 = vmatprep.subr.bf16.mxu0 0
    %363 = vmatpush1.bf16.msra.mxu0 0
    %364 = vmatprep.subr.bf16.mxu0 0
    %365 = vmatpush1.bf16.msra.mxu0 0
    %366 = vmatprep.subr.bf16.mxu0 0
    %367 = vmatpush1.bf16.msra.mxu0 0
    %368 = vmatprep.subr.bf16.mxu0 0
    %369 = vmatpush1.bf16.msra.mxu0 0
    %370 = vmatprep.subr.bf16.mxu0 0
    %371 = vmatpush1.bf16.msra.mxu0 0
    %372 = vmatprep.subr.bf16.mxu0 0
    %373 = vmatpush1.bf16.msra.mxu0 0
    %374 = vmatprep.subr.bf16.mxu0 0
    %375 = vmatpush1.bf16.msra.mxu0 0
    %376 = vmatprep.subr.bf16.mxu0 0
    %377 = vmatpush1.bf16.msra.mxu0 0
    %378 = vmatprep.subr.bf16.mxu0 0
    %379 = vmatpush1.bf16.msra.mxu0 0
    %380 = vmatprep.subr.bf16.mxu0 0
    %381 = vmatpush1.bf16.msra.mxu0 0
    %382 = vmatprep.subr.bf16.mxu0 0
    %383 = vmatpush1.bf16.msra.mxu0 0
    %384 = vmatprep.subr.bf16.mxu0 0
    %385 = vmatpush1.bf16.msra.mxu0 0
    %386 = vmatprep.mubr.bf16.mxu0 0
    %387 = vmatmul.mubr.bf16.gmra.mrb[0].mxu0 %v343
    %v388 = vpop.f32.mrb[0].mxu0
    %v389 = vadd.f32 %v264, %v388
    %v390 = vpop.f32.mrb[0].mxu0
    %v391 = vadd.f32 %v266, %v390
    %v392 = vpop.f32.mrb[0].mxu0
    %v393 = vadd.f32 %v268, %v392
    %v394 = vpop.f32.mrb[0].mxu0
    %v395 = vadd.f32 %v270, %v394
    %396 = vmatprep.mubr.bf16.mxu0 0
    %397 = vmatmul.mubr.bf16.gmra.mrb[0].mxu0 %v346
    %v398 = vpop.f32.mrb[0].mxu0
    %v399 = vadd.f32 %v274, %v398
    %v400 = vpop.f32.mrb[0].mxu0
    %v401 = vadd.f32 %v276, %v400
    %v402 = vpop.f32.mrb[0].mxu0
    %v403 = vadd.f32 %v278, %v402
    %v404 = vpop.f32.mrb[0].mxu0
    %v405 = vadd.f32 %v280, %v404
    %406 = vmatprep.mubr.bf16.mxu0 0
    %407 = vmatmul.mubr.bf16.gmra.mrb[0].mxu0 %v349
    %v408 = vpop.f32.mrb[0].mxu0
    %v409 = vadd.f32 %v284, %v408
    %v410 = vpop.f32.mrb[0].mxu0
    %v411 = vadd.f32 %v286, %v410
    %v412 = vpop.f32.mrb[0].mxu0
    %v413 = vadd.f32 %v288, %v412
    %v414 = vpop.f32.mrb[0].mxu0
    %v415 = vadd.f32 %v290, %v414
    %416 = vmatprep.mubr.bf16.mxu0 0
    %417 = vmatmul.mubr.bf16.gmra.mrb[0].mxu0 %v352
    %v418 = vpop.f32.mrb[0].mxu0
    %v419 = vadd.f32 %v294, %v418
    %v420 = vpop.f32.mrb[0].mxu0
    %v421 = vadd.f32 %v296, %v420
    %v422 = vpop.f32.mrb[0].mxu0
    %v423 = vadd.f32 %v298, %v422
    %v424 = vpop.f32.mrb[0].mxu0
    %v425 = vadd.f32 %v300, %v424
    %426 = vdwg.mxu0
    %v427 = vld [vmem:[%s5] sm:$0xff]
    %v428 = vld [vmem:[%s5 + $0x8] sm:$0xff]
    %v429 = vld [vmem:[%s5 + $0x10] sm:$0xff]
    %v430 = vld [vmem:[%s5 + $0x18] sm:$0xff]
    %v431 = vld [vmem:[%s5 + $0x20] sm:$0xff]
    %v432 = vld [vmem:[%s5 + $0x28] sm:$0xff]
    %v433 = vld [vmem:[%s5 + $0x30] sm:$0xff]
    %v434 = vld [vmem:[%s5 + $0x38] sm:$0xff]
    %436 = vset.pattern.permute.xlu0 0
    %437 = vperm.xlu0 %436, %v427
    %v438 = vpop.permute.xlu0 %437
    %441 = vset.pattern.permute.xlu0 0
    %442 = vperm.xlu0 %441, %v428
    %v443 = vpop.permute.xlu0 %442
    %446 = vset.pattern.permute.xlu0 0
    %447 = vperm.xlu0 %446, %v429
    %v448 = vpop.permute.xlu0 %447
    %451 = vset.pattern.permute.xlu0 0
    %452 = vperm.xlu0 %451, %v430
    %v453 = vpop.permute.xlu0 %452
    %456 = vset.pattern.permute.xlu0 0
    %457 = vperm.xlu0 %456, %v431
    %v458 = vpop.permute.xlu0 %457
    %461 = vset.pattern.permute.xlu0 0
    %462 = vperm.xlu0 %461, %v432
    %v463 = vpop.permute.xlu0 %462
    %466 = vset.pattern.permute.xlu0 0
    %467 = vperm.xlu0 %466, %v433
    %v468 = vpop.permute.xlu0 %467
    %471 = vset.pattern.permute.xlu0 0
    %472 = vperm.xlu0 %471, %v434
    %v473 = vpop.permute.xlu0 %472
    %v475 = vadd.f32 %v389, %v438
    %v476 = vadd.f32 %v391, %v438
    %v477 = vadd.f32 %v393, %v443
    %v478 = vadd.f32 %v395, %v443
    %v479 = vadd.f32 %v399, %v448
    %v480 = vadd.f32 %v401, %v448
    %v481 = vadd.f32 %v403, %v453
    %v482 = vadd.f32 %v405, %v453
    %v483 = vadd.f32 %v409, %v458
    %v484 = vadd.f32 %v411, %v458
    %v485 = vadd.f32 %v413, %v463
    %v486 = vadd.f32 %v415, %v463
    %v487 = vadd.f32 %v419, %v468
    %v488 = vadd.f32 %v421, %v468
    %v489 = vadd.f32 %v423, %v473
    %v490 = vadd.f32 %v425, %v473
    %v491 = vmax.f32 %v475, 0.0
    %v492 = vmax.f32 %v476, 0.0
    %v493 = vmax.f32 %v477, 0.0
    %v494 = vmax.f32 %v478, 0.0
    %v495 = vmax.f32 %v479, 0.0
    %v496 = vmax.f32 %v480, 0.0
    %v497 = vmax.f32 %v481, 0.0
    %v498 = vmax.f32 %v482, 0.0
    %v499 = vmax.f32 %v483, 0.0
    %v500 = vmax.f32 %v484, 0.0
    %v501 = vmax.f32 %v485, 0.0
    %v502 = vmax.f32 %v486, 0.0
    %v503 = vmax.f32 %v487, 0.0
    %v504 = vmax.f32 %v488, 0.0
    %v505 = vmax.f32 %v489, 0.0
    %v506 = vmax.f32 %v490, 0.0
    %v507 = vld [vmem:[%s6] sm:$0xf]
    %v508 = vpack.c.bf16 %v493, %v491
    %v509 = vpack.c.bf16 %v494, %v492
    %v510 = vpack.c.bf16 %v497, %v495
    %v511 = vpack.c.bf16 %v498, %v496
    %v512 = vpack.c.bf16 %v501, %v499
    %v513 = vpack.c.bf16 %v502, %v500
    %v514 = vpack.c.bf16 %v505, %v503
    %v515 = vpack.c.bf16 %v506, %v504
    %v516 = vld [vmem:[%s7] sm:$0xff]
    %518 = vset.pattern.permute.xlu0 0
    %519 = vperm.xlu0 %518, %v516
    %v520 = vpop.permute.xlu0 %519
    %v523 = vsel %vm216, %v507, 0
    %525 = vmatprep.subr.bf16.mxu0 %v509
    %526 = vmatpush1.bf16.msra.mxu0 %v508
    %527 = vmatprep.subr.bf16.mxu0 %v511
    %528 = vmatpush1.bf16.msra.mxu0 %v510
    %529 = vmatprep.subr.bf16.mxu0 %v513
    %530 = vmatpush1.bf16.msra.mxu0 %v512
    %531 = vmatprep.subr.bf16.mxu0 %v515
    %532 = vmatpush1.bf16.msra.mxu0 %v514
    %533 = vmatprep.subr.bf16.mxu0 0
    %534 = vmatpush1.bf16.msra.mxu0 0
    %535 = vmatprep.subr.bf16.mxu0 0
    %536 = vmatpush1.bf16.msra.mxu0 0
    %537 = vmatprep.subr.bf16.mxu0 0
    %538 = vmatpush1.bf16.msra.mxu0 0
    %539 = vmatprep.subr.bf16.mxu0 0
    %540 = vmatpush1.bf16.msra.mxu0 0
    %541 = vmatprep.subr.bf16.mxu0 0
    %542 = vmatpush1.bf16.msra.mxu0 0
    %543 = vmatprep.subr.bf16.mxu0 0
    %544 = vmatpush1.bf16.msra.mxu0 0
    %545 = vmatprep.subr.bf16.mxu0 0
    %546 = vmatpush1.bf16.msra.mxu0 0
    %547 = vmatprep.subr.bf16.mxu0 0
    %548 = vmatpush1.bf16.msra.mxu0 0
    %549 = vmatprep.subr.bf16.mxu0 0
    %550 = vmatpush1.bf16.msra.mxu0 0
    %551 = vmatprep.subr.bf16.mxu0 0
    %552 = vmatpush1.bf16.msra.mxu0 0
    %553 = vmatprep.subr.bf16.mxu0 0
    %554 = vmatpush1.bf16.msra.mxu0 0
    %555 = vmatprep.subr.bf16.mxu0 0
    %556 = vmatpush1.bf16.msra.mxu0 0
    %557 = vmatprep.mubr.bf16.mxu0 0
    %558 = vmatmul.mubr.bf16.gmra.mrb[0].mxu0 %v523
    %v559 = vpop.f32.mrb[0].mxu0
    %v560 = vadd.f32 %v520, %v559
    %v561 = vpop.f32.mrb[0].mxu0
    %v562 = vadd.f32 %v520, %v561
    %v563 = vpop.f32.mrb[0].mxu0
    %v564 = vpop.f32.mrb[0].mxu0
    %565 = vdwg.mxu0
    %566 = vst [vmem:[#allocation2] sm:$0xff] %v560
    %567 = vst [vmem:[#allocation2 + $0x8] sm:$0xff] %v562
    %v568 = vld [vmem:[%s4] sm:$0xf]
    %v569 = vld [vmem:[%s4 + $0x4] sm:$0xf]
    %v570 = vld [vmem:[%s4 + $0x8] sm:$0xf]
    %v571 = vld [vmem:[%s4 + $0xc] sm:$0xf]
    %v572 = vld [vmem:[%s4 + $0x10] sm:$0xf]
    %v573 = vld [vmem:[%s4 + $0x14] sm:$0xf]
    %v574 = vld [vmem:[%s4 + $0x18] sm:$0xf]
    %v575 = vld [vmem:[%s4 + $0x1c] sm:$0xf]
    %s576 = scalar_lea.vmem %s1, 128
    %v577 = vld [vmem:[%s576] sm:$0xff]
    %v578 = vld [vmem:[%s576 + $0x8] sm:$0xff]
    %v579 = vld [vmem:[%s576 + $0x10] sm:$0xff]
    %v580 = vld [vmem:[%s576 + $0x18] sm:$0xff]
    %v581 = vld [vmem:[%s576 + $0x20] sm:$0xff]
    %v582 = vld [vmem:[%s576 + $0x28] sm:$0xff]
    %v583 = vld [vmem:[%s576 + $0x30] sm:$0xff]
    %v584 = vld [vmem:[%s576 + $0x38] sm:$0xff]
    %v585 = vld [vmem:[%s576 + $0x40] sm:$0xff]
    %v586 = vld [vmem:[%s576 + $0x48] sm:$0xff]
    %v587 = vld [vmem:[%s576 + $0x50] sm:$0xff]
    %v588 = vld [vmem:[%s576 + $0x58] sm:$0xff]
    %v589 = vld [vmem:[%s576 + $0x60] sm:$0xff]
    %v590 = vld [vmem:[%s576 + $0x68] sm:$0xff]
    %v591 = vld [vmem:[%s576 + $0x70] sm:$0xff]
    %v592 = vld [vmem:[%s576 + $0x78] sm:$0xff]
    %v593 = vpack.c.bf16 %v578, %v577
    %v594 = vpack.c.bf16 %v580, %v579
    %v595 = vpack.c.bf16 %v582, %v581
    %v596 = vpack.c.bf16 %v584, %v583
    %v597 = vpack.c.bf16 %v586, %v585
    %v598 = vpack.c.bf16 %v588, %v587
    %v599 = vpack.c.bf16 %v590, %v589
    %v600 = vpack.c.bf16 %v592, %v591
    %v609 = vunpack.c.l.b16 %v568
    %v610 = vunpack.c.l.b16 %v569
    %v611 = vunpack.c.l.b16 %v570
    %v612 = vunpack.c.l.b16 %v571
    %v613 = vunpack.c.l.b16 %v572
    %v614 = vunpack.c.l.b16 %v573
    %v615 = vunpack.c.l.b16 %v574
    %v616 = vunpack.c.l.b16 %v575
    %v617 = vpack.c.b16 %v610, %v609
    %v618 = vpack.c.b16 %v612, %v611
    %v619 = vpack.c.b16 %v614, %v613
    %v620 = vpack.c.b16 %v616, %v615
    %625 = vmatprep.subr.bf16.mxu0 0
    %626 = vmatpush1.bf16.msra.mxu0 %v593
    %627 = vmatprep.subr.bf16.mxu0 0
    %628 = vmatpush1.bf16.msra.mxu0 %v594
    %629 = vmatprep.subr.bf16.mxu0 0
    %630 = vmatpush1.bf16.msra.mxu0 %v595
    %631 = vmatprep.subr.bf16.mxu0 0
    %632 = vmatpush1.bf16.msra.mxu0 %v596
    %633 = vmatprep.subr.bf16.mxu0 0
    %634 = vmatpush1.bf16.msra.mxu0 %v597
    %635 = vmatprep.subr.bf16.mxu0 0
    %636 = vmatpush1.bf16.msra.mxu0 %v598
    %637 = vmatprep.subr.bf16.mxu0 0
    %638 = vmatpush1.bf16.msra.mxu0 %v599
    %639 = vmatprep.subr.bf16.mxu0 0
    %640 = vmatpush1.bf16.msra.mxu0 %v600
    %641 = vmatprep.subr.bf16.mxu0 0
    %642 = vmatpush1.bf16.msra.mxu0 0
    %643 = vmatprep.subr.bf16.mxu0 0
    %644 = vmatpush1.bf16.msra.mxu0 0
    %645 = vmatprep.subr.bf16.mxu0 0
    %646 = vmatpush1.bf16.msra.mxu0 0
    %647 = vmatprep.subr.bf16.mxu0 0
    %648 = vmatpush1.bf16.msra.mxu0 0
    %649 = vmatprep.subr.bf16.mxu0 0
    %650 = vmatpush1.bf16.msra.mxu0 0
    %651 = vmatprep.subr.bf16.mxu0 0
    %652 = vmatpush1.bf16.msra.mxu0 0
    %653 = vmatprep.subr.bf16.mxu0 0
    %654 = vmatpush1.bf16.msra.mxu0 0
    %655 = vmatprep.subr.bf16.mxu0 0
    %656 = vmatpush1.bf16.msra.mxu0 0
    %657 = vmatprep.mubr.bf16.mxu0 0
    %658 = vmatmul.mubr.bf16.gmra.mrb[0].mxu0 %v617
    %v659 = vpop.f32.mrb[0].mxu0
    %v660 = vadd.f32 0.0, %v659
    %v661 = vpop.f32.mrb[0].mxu0
    %v662 = vpop.f32.mrb[0].mxu0
    %v663 = vadd.f32 0.0, %v662
    %v664 = vpop.f32.mrb[0].mxu0
    %665 = vmatprep.mubr.bf16.mxu0 0
    %666 = vmatmul.mubr.bf16.gmra.mrb[0].mxu0 %v618
    %v667 = vpop.f32.mrb[0].mxu0
    %v668 = vadd.f32 0.0, %v667
    %v669 = vpop.f32.mrb[0].mxu0
    %v670 = vpop.f32.mrb[0].mxu0
    %v671 = vadd.f32 0.0, %v670
    %v672 = vpop.f32.mrb[0].mxu0
    %673 = vmatprep.mubr.bf16.mxu0 0
    %674 = vmatmul.mubr.bf16.gmra.mrb[0].mxu0 %v619
    %v675 = vpop.f32.mrb[0].mxu0
    %v676 = vadd.f32 0.0, %v675
    %v677 = vpop.f32.mrb[0].mxu0
    %v678 = vpop.f32.mrb[0].mxu0
    %v679 = vadd.f32 0.0, %v678
    %v680 = vpop.f32.mrb[0].mxu0
    %681 = vmatprep.mubr.bf16.mxu0 0
    %682 = vmatmul.mubr.bf16.gmra.mrb[0].mxu0 %v620
    %v683 = vpop.f32.mrb[0].mxu0
    %v684 = vadd.f32 0.0, %v683
    %v685 = vpop.f32.mrb[0].mxu0
    %v686 = vpop.f32.mrb[0].mxu0
    %v687 = vadd.f32 0.0, %v686
    %v688 = vpop.f32.mrb[0].mxu0
    %689 = vdwg.mxu0
    %v690 = vpack.c.bf16 %v663, %v660
    %v691 = vpack.c.bf16 %v671, %v668
    %v692 = vpack.c.bf16 %v679, %v676
    %v693 = vpack.c.bf16 %v687, %v684
    %v694 = vld [vmem:[%s2] sm:$0xff]
    %v695 = vld [vmem:[%s2 + $0x8] sm:$0xff]
    %v696 = vld [vmem:[%s2 + $0x10] sm:$0xff]
    %v697 = vld [vmem:[%s2 + $0x18] sm:$0xff]
    %v698 = vld [vmem:[%s2 + $0x20] sm:$0xff]
    %v699 = vld [vmem:[%s2 + $0x28] sm:$0xff]
    %v700 = vld [vmem:[%s2 + $0x30] sm:$0xff]
    %v701 = vld [vmem:[%s2 + $0x38] sm:$0xff]
    %v702 = vld [vmem:[%s3] sm:$0xf]
    %v703 = vld [vmem:[%s3 + $0x4] sm:$0xf]
    %v704 = vld [vmem:[%s3 + $0x8] sm:$0xf]
    %v705 = vld [vmem:[%s3 + $0xc] sm:$0xf]
    %v706 = vld [vmem:[%s3 + $0x10] sm:$0xf]
    %v707 = vld [vmem:[%s3 + $0x14] sm:$0xf]
    %v708 = vld [vmem:[%s3 + $0x18] sm:$0xf]
    %v709 = vld [vmem:[%s3 + $0x1c] sm:$0xf]
    %s710 = scalar_lea.vmem %s0, 128
    %v711 = vld [vmem:[%s710] sm:$0xff]
    %v712 = vld [vmem:[%s710 + $0x8] sm:$0xff]
    %v713 = vld [vmem:[%s710 + $0x10] sm:$0xff]
    %v714 = vld [vmem:[%s710 + $0x18] sm:$0xff]
    %v715 = vld [vmem:[%s710 + $0x20] sm:$0xff]
    %v716 = vld [vmem:[%s710 + $0x28] sm:$0xff]
    %v717 = vld [vmem:[%s710 + $0x30] sm:$0xff]
    %v718 = vld [vmem:[%s710 + $0x38] sm:$0xff]
    %v719 = vld [vmem:[%s710 + $0x40] sm:$0xff]
    %v720 = vld [vmem:[%s710 + $0x48] sm:$0xff]
    %v721 = vld [vmem:[%s710 + $0x50] sm:$0xff]
    %v722 = vld [vmem:[%s710 + $0x58] sm:$0xff]
    %v723 = vld [vmem:[%s710 + $0x60] sm:$0xff]
    %v724 = vld [vmem:[%s710 + $0x68] sm:$0xff]
    %v725 = vld [vmem:[%s710 + $0x70] sm:$0xff]
    %v726 = vld [vmem:[%s710 + $0x78] sm:$0xff]
    %v727 = vpack.c.bf16 %v713, %v711
    %v728 = vpack.c.bf16 %v714, %v712
    %v729 = vpack.c.bf16 %v717, %v715
    %v730 = vpack.c.bf16 %v718, %v716
    %v731 = vpack.c.bf16 %v721, %v719
    %v732 = vpack.c.bf16 %v722, %v720
    %v733 = vpack.c.bf16 %v725, %v723
    %v734 = vpack.c.bf16 %v726, %v724
    %v743 = vunpack.c.l.b16 %v702
    %v744 = vunpack.c.l.b16 %v703
    %v745 = vunpack.c.l.b16 %v704
    %v746 = vunpack.c.l.b16 %v705
    %v747 = vunpack.c.l.b16 %v706
    %v748 = vunpack.c.l.b16 %v707
    %v749 = vunpack.c.l.b16 %v708
    %v750 = vunpack.c.l.b16 %v709
    %v751 = vpack.c.b16 %v744, %v743
    %v752 = vpack.c.b16 %v746, %v745
    %v753 = vpack.c.b16 %v748, %v747
    %v754 = vpack.c.b16 %v750, %v749
    %v756 = vsel %vm216, %v751, 0
    %v759 = vsel %vm216, %v752, 0
    %v762 = vsel %vm216, %v753, 0
    %v765 = vsel %vm216, %v754, 0
    %767 = vmatprep.subr.bf16.mxu0 %v728
    %768 = vmatpush1.bf16.msra.mxu0 %v727
    %769 = vmatprep.subr.bf16.mxu0 %v730
    %770 = vmatpush1.bf16.msra.mxu0 %v729
    %771 = vmatprep.subr.bf16.mxu0 %v732
    %772 = vmatpush1.bf16.msra.mxu0 %v731
    %773 = vmatprep.subr.bf16.mxu0 %v734
    %774 = vmatpush1.bf16.msra.mxu0 %v733
    %775 = vmatprep.subr.bf16.mxu0 0
    %776 = vmatpush1.bf16.msra.mxu0 0
    %777 = vmatprep.subr.bf16.mxu0 0
    %778 = vmatpush1.bf16.msra.mxu0 0
    %779 = vmatprep.subr.bf16.mxu0 0
    %780 = vmatpush1.bf16.msra.mxu0 0
    %781 = vmatprep.subr.bf16.mxu0 0
    %782 = vmatpush1.bf16.msra.mxu0 0
    %783 = vmatprep.subr.bf16.mxu0 0
    %784 = vmatpush1.bf16.msra.mxu0 0
    %785 = vmatprep.subr.bf16.mxu0 0
    %786 = vmatpush1.bf16.msra.mxu0 0
    %787 = vmatprep.subr.bf16.mxu0 0
    %788 = vmatpush1.bf16.msra.mxu0 0
    %789 = vmatprep.subr.bf16.mxu0 0
    %790 = vmatpush1.bf16.msra.mxu0 0
    %791 = vmatprep.subr.bf16.mxu0 0
    %792 = vmatpush1.bf16.msra.mxu0 0
    %793 = vmatprep.subr.bf16.mxu0 0
    %794 = vmatpush1.bf16.msra.mxu0 0
    %795 = vmatprep.subr.bf16.mxu0 0
    %796 = vmatpush1.bf16.msra.mxu0 0
    %797 = vmatprep.subr.bf16.mxu0 0
    %798 = vmatpush1.bf16.msra.mxu0 0
    %799 = vmatprep.mubr.bf16.mxu0 0
    %800 = vmatmul.mubr.bf16.gmra.mrb[0].mxu0 %v756
    %v801 = vpop.f32.mrb[0].mxu0
    %v802 = vadd.f32 0.0, %v801
    %v803 = vpop.f32.mrb[0].mxu0
    %v804 = vadd.f32 0.0, %v803
    %v805 = vpop.f32.mrb[0].mxu0
    %v806 = vadd.f32 0.0, %v805
    %v807 = vpop.f32.mrb[0].mxu0
    %v808 = vadd.f32 0.0, %v807
    %809 = vmatprep.mubr.bf16.mxu0 0
    %810 = vmatmul.mubr.bf16.gmra.mrb[0].mxu0 %v759
    %v811 = vpop.f32.mrb[0].mxu0
    %v812 = vadd.f32 0.0, %v811
    %v813 = vpop.f32.mrb[0].mxu0
    %v814 = vadd.f32 0.0, %v813
    %v815 = vpop.f32.mrb[0].mxu0
    %v816 = vadd.f32 0.0, %v815
    %v817 = vpop.f32.mrb[0].mxu0
    %v818 = vadd.f32 0.0, %v817
    %819 = vmatprep.mubr.bf16.mxu0 0
    %820 = vmatmul.mubr.bf16.gmra.mrb[0].mxu0 %v762
    %v821 = vpop.f32.mrb[0].mxu0
    %v822 = vadd.f32 0.0, %v821
    %v823 = vpop.f32.mrb[0].mxu0
    %v824 = vadd.f32 0.0, %v823
    %v825 = vpop.f32.mrb[0].mxu0
    %v826 = vadd.f32 0.0, %v825
    %v827 = vpop.f32.mrb[0].mxu0
    %v828 = vadd.f32 0.0, %v827
    %829 = vmatprep.mubr.bf16.mxu0 0
    %830 = vmatmul.mubr.bf16.gmra.mrb[0].mxu0 %v765
    %v831 = vpop.f32.mrb[0].mxu0
    %v832 = vadd.f32 0.0, %v831
    %v833 = vpop.f32.mrb[0].mxu0
    %v834 = vadd.f32 0.0, %v833
    %v835 = vpop.f32.mrb[0].mxu0
    %v836 = vadd.f32 0.0, %v835
    %v837 = vpop.f32.mrb[0].mxu0
    %v838 = vadd.f32 0.0, %v837
    %839 = vdwg.mxu0
    %v848 = vunpack.c.l.b16 %v694
    %v849 = vunpack.c.h.b16 %v694
    %v850 = vunpack.c.l.b16 %v695
    %v851 = vunpack.c.h.b16 %v695
    %v852 = vunpack.c.l.b16 %v696
    %v853 = vunpack.c.h.b16 %v696
    %v854 = vunpack.c.l.b16 %v697
    %v855 = vunpack.c.h.b16 %v697
    %v856 = vunpack.c.l.b16 %v698
    %v857 = vunpack.c.h.b16 %v698
    %v858 = vunpack.c.l.b16 %v699
    %v859 = vunpack.c.h.b16 %v699
    %v860 = vunpack.c.l.b16 %v700
    %v861 = vunpack.c.h.b16 %v700
    %v862 = vunpack.c.l.b16 %v701
    %v863 = vunpack.c.h.b16 %v701
    %v864 = vpack.c.b16 %v850, %v848
    %v865 = vpack.c.b16 %v851, %v849
    %v866 = vpack.c.b16 %v854, %v852
    %v867 = vpack.c.b16 %v855, %v853
    %v868 = vpack.c.b16 %v858, %v856
    %v869 = vpack.c.b16 %v859, %v857
    %v870 = vpack.c.b16 %v862, %v860
    %v871 = vpack.c.b16 %v863, %v861
    %v881 = vsel %vm216, %v690, 0
    %v884 = vsel %vm216, %v691, 0
    %v887 = vsel %vm216, %v692, 0
    %v890 = vsel %vm216, %v693, 0
    %892 = vmatprep.subr.bf16.mxu0 %v865
    %893 = vmatpush1.bf16.msra.mxu0 %v864
    %894 = vmatprep.subr.bf16.mxu0 %v867
    %895 = vmatpush1.bf16.msra.mxu0 %v866
    %896 = vmatprep.subr.bf16.mxu0 %v869
    %897 = vmatpush1.bf16.msra.mxu0 %v868
    %898 = vmatprep.subr.bf16.mxu0 %v871
    %899 = vmatpush1.bf16.msra.mxu0 %v870
    %900 = vmatprep.subr.bf16.mxu0 0
    %901 = vmatpush1.bf16.msra.mxu0 0
    %902 = vmatprep.subr.bf16.mxu0 0
    %903 = vmatpush1.bf16.msra.mxu0 0
    %904 = vmatprep.subr.bf16.mxu0 0
    %905 = vmatpush1.bf16.msra.mxu0 0
    %906 = vmatprep.subr.bf16.mxu0 0
    %907 = vmatpush1.bf16.msra.mxu0 0
    %908 = vmatprep.subr.bf16.mxu0 0
    %909 = vmatpush1.bf16.msra.mxu0 0
    %910 = vmatprep.subr.bf16.mxu0 0
    %911 = vmatpush1.bf16.msra.mxu0 0
    %912 = vmatprep.subr.bf16.mxu0 0
    %913 = vmatpush1.bf16.msra.mxu0 0
    %914 = vmatprep.subr.bf16.mxu0 0
    %915 = vmatpush1.bf16.msra.mxu0 0
    %916 = vmatprep.subr.bf16.mxu0 0
    %917 = vmatpush1.bf16.msra.mxu0 0
    %918 = vmatprep.subr.bf16.mxu0 0
    %919 = vmatpush1.bf16.msra.mxu0 0
    %920 = vmatprep.subr.bf16.mxu0 0
    %921 = vmatpush1.bf16.msra.mxu0 0
    %922 = vmatprep.subr.bf16.mxu0 0
    %923 = vmatpush1.bf16.msra.mxu0 0
    %924 = vmatprep.mubr.bf16.mxu0 0
    %925 = vmatmul.mubr.bf16.gmra.mrb[0].mxu0 %v881
    %v926 = vpop.f32.mrb[0].mxu0
    %v927 = vadd.f32 %v802, %v926
    %v928 = vpop.f32.mrb[0].mxu0
    %v929 = vadd.f32 %v804, %v928
    %v930 = vpop.f32.mrb[0].mxu0
    %v931 = vadd.f32 %v806, %v930
    %v932 = vpop.f32.mrb[0].mxu0
    %v933 = vadd.f32 %v808, %v932
    %934 = vmatprep.mubr.bf16.mxu0 0
    %935 = vmatmul.mubr.bf16.gmra.mrb[0].mxu0 %v884
    %v936 = vpop.f32.mrb[0].mxu0
    %v937 = vadd.f32 %v812, %v936
    %v938 = vpop.f32.mrb[0].mxu0
    %v939 = vadd.f32 %v814, %v938
    %v940 = vpop.f32.mrb[0].mxu0
    %v941 = vadd.f32 %v816, %v940
    %v942 = vpop.f32.mrb[0].mxu0
    %v943 = vadd.f32 %v818, %v942
    %944 = vmatprep.mubr.bf16.mxu0 0
    %945 = vmatmul.mubr.bf16.gmra.mrb[0].mxu0 %v887
    %v946 = vpop.f32.mrb[0].mxu0
    %v947 = vadd.f32 %v822, %v946
    %v948 = vpop.f32.mrb[0].mxu0
    %v949 = vadd.f32 %v824, %v948
    %v950 = vpop.f32.mrb[0].mxu0
    %v951 = vadd.f32 %v826, %v950
    %v952 = vpop.f32.mrb[0].mxu0
    %v953 = vadd.f32 %v828, %v952
    %954 = vmatprep.mubr.bf16.mxu0 0
    %955 = vmatmul.mubr.bf16.gmra.mrb[0].mxu0 %v890
    %v956 = vpop.f32.mrb[0].mxu0
    %v957 = vadd.f32 %v832, %v956
    %v958 = vpop.f32.mrb[0].mxu0
    %v959 = vadd.f32 %v834, %v958
    %v960 = vpop.f32.mrb[0].mxu0
    %v961 = vadd.f32 %v836, %v960
    %v962 = vpop.f32.mrb[0].mxu0
    %v963 = vadd.f32 %v838, %v962
    %964 = vdwg.mxu0
    %v965 = vld [vmem:[%s5] sm:$0xff]
    %v966 = vld [vmem:[%s5 + $0x8] sm:$0xff]
    %v967 = vld [vmem:[%s5 + $0x10] sm:$0xff]
    %v968 = vld [vmem:[%s5 + $0x18] sm:$0xff]
    %v969 = vld [vmem:[%s5 + $0x20] sm:$0xff]
    %v970 = vld [vmem:[%s5 + $0x28] sm:$0xff]
    %v971 = vld [vmem:[%s5 + $0x30] sm:$0xff]
    %v972 = vld [vmem:[%s5 + $0x38] sm:$0xff]
    %974 = vset.pattern.permute.xlu0 0
    %975 = vperm.xlu0 %974, %v965
    %v976 = vpop.permute.xlu0 %975
    %979 = vset.pattern.permute.xlu0 0
    %980 = vperm.xlu0 %979, %v966
    %v981 = vpop.permute.xlu0 %980
    %984 = vset.pattern.permute.xlu0 0
    %985 = vperm.xlu0 %984, %v967
    %v986 = vpop.permute.xlu0 %985
    %989 = vset.pattern.permute.xlu0 0
    %990 = vperm.xlu0 %989, %v968
    %v991 = vpop.permute.xlu0 %990
    %994 = vset.pattern.permute.xlu0 0
    %995 = vperm.xlu0 %994, %v969
    %v996 = vpop.permute.xlu0 %995
    %999 = vset.pattern.permute.xlu0 0
    %1000 = vperm.xlu0 %999, %v970
    %v1001 = vpop.permute.xlu0 %1000
    %1004 = vset.pattern.permute.xlu0 0
    %1005 = vperm.xlu0 %1004, %v971
    %v1006 = vpop.permute.xlu0 %1005
    %1009 = vset.pattern.permute.xlu0 0
    %1010 = vperm.xlu0 %1009, %v972
    %v1011 = vpop.permute.xlu0 %1010
    %v1013 = vadd.f32 %v927, %v976
    %v1014 = vadd.f32 %v929, %v976
    %v1015 = vadd.f32 %v931, %v981
    %v1016 = vadd.f32 %v933, %v981
    %v1017 = vadd.f32 %v937, %v986
    %v1018 = vadd.f32 %v939, %v986
    %v1019 = vadd.f32 %v941, %v991
    %v1020 = vadd.f32 %v943, %v991
    %v1021 = vadd.f32 %v947, %v996
    %v1022 = vadd.f32 %v949, %v996
    %v1023 = vadd.f32 %v951, %v1001
    %v1024 = vadd.f32 %v953, %v1001
    %v1025 = vadd.f32 %v957, %v1006
    %v1026 = vadd.f32 %v959, %v1006
    %v1027 = vadd.f32 %v961, %v1011
    %v1028 = vadd.f32 %v963, %v1011
    %v1029 = vmax.f32 %v1013, 0.0
    %v1030 = vmax.f32 %v1014, 0.0
    %v1031 = vmax.f32 %v1015, 0.0
    %v1032 = vmax.f32 %v1016, 0.0
    %v1033 = vmax.f32 %v1017, 0.0
    %v1034 = vmax.f32 %v1018, 0.0
    %v1035 = vmax.f32 %v1019, 0.0
    %v1036 = vmax.f32 %v1020, 0.0
    %v1037 = vmax.f32 %v1021, 0.0
    %v1038 = vmax.f32 %v1022, 0.0
    %v1039 = vmax.f32 %v1023, 0.0
    %v1040 = vmax.f32 %v1024, 0.0
    %v1041 = vmax.f32 %v1025, 0.0
    %v1042 = vmax.f32 %v1026, 0.0
    %v1043 = vmax.f32 %v1027, 0.0
    %v1044 = vmax.f32 %v1028, 0.0
    %v1045 = vld [vmem:[%s6] sm:$0xf]
    %v1046 = vpack.c.bf16 %v1031, %v1029
    %v1047 = vpack.c.bf16 %v1032, %v1030
    %v1048 = vpack.c.bf16 %v1035, %v1033
    %v1049 = vpack.c.bf16 %v1036, %v1034
    %v1050 = vpack.c.bf16 %v1039, %v1037
    %v1051 = vpack.c.bf16 %v1040, %v1038
    %v1052 = vpack.c.bf16 %v1043, %v1041
    %v1053 = vpack.c.bf16 %v1044, %v1042
    %v1054 = vld [vmem:[%s7] sm:$0xff]
    %1056 = vset.pattern.permute.xlu0 0
    %1057 = vperm.xlu0 %1056, %v1054
    %v1058 = vpop.permute.xlu0 %1057
    %v1061 = vsel %vm216, %v1045, 0
    %1063 = vmatprep.subr.bf16.mxu0 %v1047
    %1064 = vmatpush1.bf16.msra.mxu0 %v1046
    %1065 = vmatprep.subr.bf16.mxu0 %v1049
    %1066 = vmatpush1.bf16.msra.mxu0 %v1048
    %1067 = vmatprep.subr.bf16.mxu0 %v1051
    %1068 = vmatpush1.bf16.msra.mxu0 %v1050
    %1069 = vmatprep.subr.bf16.mxu0 %v1053
    %1070 = vmatpush1.bf16.msra.mxu0 %v1052
    %1071 = vmatprep.subr.bf16.mxu0 0
    %1072 = vmatpush1.bf16.msra.mxu0 0
    %1073 = vmatprep.subr.bf16.mxu0 0
    %1074 = vmatpush1.bf16.msra.mxu0 0
    %1075 = vmatprep.subr.bf16.mxu0 0
    %1076 = vmatpush1.bf16.msra.mxu0 0
    %1077 = vmatprep.subr.bf16.mxu0 0
    %1078 = vmatpush1.bf16.msra.mxu0 0
    %1079 = vmatprep.subr.bf16.mxu0 0
    %1080 = vmatpush1.bf16.msra.mxu0 0
    %1081 = vmatprep.subr.bf16.mxu0 0
    %1082 = vmatpush1.bf16.msra.mxu0 0
    %1083 = vmatprep.subr.bf16.mxu0 0
    %1084 = vmatpush1.bf16.msra.mxu0 0
    %1085 = vmatprep.subr.bf16.mxu0 0
    %1086 = vmatpush1.bf16.msra.mxu0 0
    %1087 = vmatprep.subr.bf16.mxu0 0
    %1088 = vmatpush1.bf16.msra.mxu0 0
    %1089 = vmatprep.subr.bf16.mxu0 0
    %1090 = vmatpush1.bf16.msra.mxu0 0
    %1091 = vmatprep.subr.bf16.mxu0 0
    %1092 = vmatpush1.bf16.msra.mxu0 0
    %1093 = vmatprep.subr.bf16.mxu0 0
    %1094 = vmatpush1.bf16.msra.mxu0 0
    %1095 = vmatprep.mubr.bf16.mxu0 0
    %1096 = vmatmul.mubr.bf16.gmra.mrb[0].mxu0 %v1061
    %v1097 = vpop.f32.mrb[0].mxu0
    %v1098 = vadd.f32 %v1058, %v1097
    %v1099 = vpop.f32.mrb[0].mxu0
    %v1100 = vadd.f32 %v1058, %v1099
    %v1101 = vpop.f32.mrb[0].mxu0
    %v1102 = vpop.f32.mrb[0].mxu0
    %1103 = vdwg.mxu0
    %s1104 = scalar_lea.vmem [#allocation2], 16
    %1105 = vst [vmem:[%s1104] sm:$0xff] %v1098
    %1106 = vst [vmem:[%s1104 + $0x8] sm:$0xff] %v1100
    // Predicated region
    $region34: #{tpu_custom_call.1} parent=1 // pred_check
      _
    $region35: #{tpu_custom_call.1} parent=1 // pred_check_branch
      %1108 = sbr.rel (0) target = $region37
    $region36: #{tpu_custom_call.1} parent=1 // pred_region
      %s1110 = ssub.s32 512, 512
      %1111 = vsyncadd [#allocation3], %s1110
      %s1112 = sshll.u32 [#allocation2], 4
      %s1113 = int_to_ptr.vmem [resolvable:$true] %s1112
      %1118 = dma.vmem_to_hbm [thread:$0]  %s1113, 512, %s8, [#allocation3], 256, 256, 16
    $region37: #{tpu_custom_call.1} parent=1 // pred_fallthru
      _
    // Predicated region
    $region38: #{tpu_custom_call.1} parent=1 // pred_check
      _
    $region39: #{tpu_custom_call.1} parent=1 // pred_check_branch
      %1120 = sbr.rel (0) target = $region41
    $region40: #{tpu_custom_call.1} parent=1 // pred_region
      %1121 = dma.done [#allocation3], 512
    $region41: #{tpu_custom_call.1} parent=1 // pred_fallthru
      _
    %1122 = vsyncpa [#allocation3], 1

</llo_original>
